<compile_context>
chip_gen: v7x
topology: tpu7x:2x2x1
jax: 0.10.0
libtpu: 0.0.40
codegen_flags: <defaults>
</compile_context>

<pallas_src>
import functools

import jax
import jax.numpy as jnp
from jax.experimental import pallas as pl
from jax.experimental.pallas import tpu as pltpu

_LANE = 128
_MIB = 1024 * 1024


def _sigmoid(x):
    # Exact sigmoid: exp lands on the EUP; the divide is VALU work, but the kernel
    # is HBM-bound so exactness is free.
    return 1.0 / (1.0 + jnp.exp(-x))


def _rgae_single_kernel(x_ref, we1_ref, be1_ref, w2_ref, b2_ref, xhat_ref, *z_out):
    # alpha statically 0 (x := x2) or 1 (x := x1): z = sigmoid(We1 @ x + be1).
    # Tiles: x (L, TN), we1 (H, L), be1 (H, 1), w2 (L, H), b2 (L, 1).
    z = _sigmoid(
        jnp.dot(we1_ref[...], x_ref[...], preferred_element_type=jnp.float32)
        + be1_ref[...])
    x_hat = _sigmoid(
        jnp.dot(w2_ref[...], z, preferred_element_type=jnp.float32)
        + b2_ref[...])
    xhat_ref[...] = x_hat.astype(xhat_ref.dtype)
    if z_out:                       # static: only present when the caller wants z
        z_out[0][...] = z.astype(z_out[0].dtype)


def _rgae_blend_kernel(x1_ref, x2_ref, we1_ref, be1_ref, w2_ref, b2_ref,
                       xhat_ref, *z_out, alpha):
    # General 0 < alpha < 1 path: two plain dots, blend the sigmoids directly
    # (no concatenate / slice VMEM copies; the MXU has enormous slack here).
    z1 = _sigmoid(
        jnp.dot(we1_ref[...], x1_ref[...], preferred_element_type=jnp.float32)
        + be1_ref[...])
    z2 = _sigmoid(
        jnp.dot(we1_ref[...], x2_ref[...], preferred_element_type=jnp.float32)
        + be1_ref[...])
    z = alpha * z1 + (1.0 - alpha) * z2
    x_hat = _sigmoid(
        jnp.dot(w2_ref[...], z, preferred_element_type=jnp.float32)
        + b2_ref[...])
    xhat_ref[...] = x_hat.astype(xhat_ref.dtype)
    if z_out:
        z_out[0][...] = z.astype(z_out[0].dtype)


def _tensorcores_per_chip():
    """Best-effort TensorCores-per-chip query (v7x has 2; v5e/v6e have 1)."""
    try:
        dev = jax.devices()[0]
    except Exception:
        return 1
    for attr in ("num_cores", "core_count"):
        v = getattr(dev, attr, None)
        if isinstance(v, int) and v > 0:
            return v
    kind = str(getattr(dev, "device_kind", "")).lower()
    if "v7" in kind or "tpu7" in kind:
        return 2
    return 1


def _canon_input(x):
    # Accept f32 or bf16 activations directly (MXU takes bf16 natively, f32
    # accumulate); only cast odd dtypes.  Never add an extra HBM pass here.
    if x.dtype == jnp.float32 or x.dtype == jnp.bfloat16:
        return x
    return x.astype(jnp.float32)


def _pick_tile_n(N, bytes_per_col_db, tile_n, n_cores, ph):
    if tile_n is None:
        # Large default so the per-step DMA (~bytes_per_col_db/2 * tile_n) dwarfs
        # the ~0.35 us fixed pipeline overhead.  Sweepable.
        tile_n = 32768
    tile_n = max(_LANE, (tile_n // _LANE) * _LANE)
    # Never exceed the lane-padded problem size.
    tile_n = min(tile_n, pl.cdiv(N, _LANE) * _LANE)
    # Keep the double-buffered working set comfortably inside every generation's
    # VMEM (v7x: 64 MiB physical).
    max_cols = max(_LANE, ((40 * _MIB) // max(bytes_per_col_db, 1) // _LANE) * _LANE)
    tile_n = min(tile_n, max_cols)
    num_col_blocks = pl.cdiv(N, tile_n)
    # Multi-TensorCore chips (v7x): make sure both cores get work when the grid
    # would collapse to a single block.  On 1-TC chips splitting just doubles the
    # per-step overhead, so skip it.
    if n_cores >= 2 and ph * num_col_blocks == 1 and tile_n % (2 * _LANE) == 0:
        tile_n //= 2
        num_col_blocks = 2
    return tile_n, num_col_blocks


def rgae_int_forward(x1, x2, We1, be1, W2, b2, *, alpha=0.0, tile_n=None,
                     out_dtype=jnp.bfloat16, return_z=True):
    """Pallas implementation of RGAE_int.forward.

    x1, x2 : (ph, L, N) float32 or bfloat16
    We1    : (H, L), be1: (H,), W2: (L, H), b2: (L,)
    Returns (x_hat, z) with shapes (ph, L, N) and (ph, H, N) (z omitted if
    return_z=False).  Compute is float32; outputs are store-cast to `out_dtype`.
    """
    ph, L, N = x1.shape
    H = We1.shape[0]
    assert x2.shape == (ph, L, N)
    assert We1.shape == (H, L) and W2.shape == (L, H)
    assert be1.shape == (H,) and b2.shape == (L,)
    alpha = float(alpha)
    single = alpha in (0.0, 1.0)
    n_streams = 1 if single else 2

    x1 = _canon_input(x1)
    x2 = _canon_input(x2)
    x_itemsize = jnp.dtype(x1.dtype).itemsize
    out_itemsize = jnp.dtype(out_dtype).itemsize

    # Double-buffered bytes per column held in VMEM (inputs + both outputs).
    bytes_per_col_db = 2 * (n_streams * L * x_itemsize + (L + H) * out_itemsize)
    n_cores = _tensorcores_per_chip()
    tile_n, num_col_blocks = _pick_tile_n(N, bytes_per_col_db, tile_n, n_cores, ph)

    We1_f = We1.astype(jnp.float32)
    W2_f = W2.astype(jnp.float32)
    be1_2d = be1.reshape(H, 1).astype(jnp.float32)
    b2_2d = b2.reshape(L, 1).astype(jnp.float32)

    grid = (ph, num_col_blocks)

    x_spec = pl.BlockSpec((pl.Squeezed(), L, tile_n), lambda p, j: (p, 0, j))
    we1_spec = pl.BlockSpec((H, L), lambda p, j: (0, 0))
    be1_spec = pl.BlockSpec((H, 1), lambda p, j: (0, 0))
    w2_spec = pl.BlockSpec((L, H), lambda p, j: (0, 0))
    b2_spec = pl.BlockSpec((L, 1), lambda p, j: (0, 0))
    xhat_spec = pl.BlockSpec((pl.Squeezed(), L, tile_n), lambda p, j: (p, 0, j))
    z_spec = pl.BlockSpec((pl.Squeezed(), H, tile_n), lambda p, j: (p, 0, j))

    if return_z:
        out_shape = (jax.ShapeDtypeStruct((ph, L, N), out_dtype),
                     jax.ShapeDtypeStruct((ph, H, N), out_dtype))
        out_specs = [xhat_spec, z_spec]
    else:
        out_shape = (jax.ShapeDtypeStruct((ph, L, N), out_dtype),)
        out_specs = [xhat_spec]

    # Advisory cost estimate (helps XLA schedule around the custom call).
    flops = 2 * ph * N * L * H * (n_streams + 1)
    transcendentals = ph * N * (n_streams * H + L)
    bytes_accessed = (ph * N * (n_streams * L * x_itemsize
                                + (L + (H if return_z else 0)) * out_itemsize)
                      + (2 * H * L + H + L) * 4)
    cost = pl.CostEstimate(flops=flops, transcendentals=transcendentals,
                           bytes_accessed=bytes_accessed)

    footprint = bytes_per_col_db * tile_n + 4 * (2 * H * L + H + L) * 4
    vmem_limit = int(min(max(footprint + 8 * _MIB, 32 * _MIB), 48 * _MIB))
    compiler_params = pltpu.CompilerParams(
        dimension_semantics=("parallel", "parallel"),
        vmem_limit_bytes=vmem_limit)

    if single:
        # z == z2 (alpha == 0, the module's setting) or z == z1 (alpha == 1):
        # the unused stream is never an operand, so it is never DMA'd from HBM.
        x_in = x1 if alpha == 1.0 else x2
        results = pl.pallas_call(
            _rgae_single_kernel,
            out_shape=out_shape,
            grid_spec=pltpu.PrefetchScalarGridSpec(
                num_scalar_prefetch=0,
                grid=grid,
                in_specs=[x_spec, we1_spec, be1_spec, w2_spec, b2_spec],
                out_specs=out_specs),
            compiler_params=compiler_params,
            cost_estimate=cost,
        )(x_in, We1_f, be1_2d, W2_f, b2_2d)
    else:
        kernel = functools.partial(_rgae_blend_kernel, alpha=alpha)
        results = pl.pallas_call(
            kernel,
            out_shape=out_shape,
            grid_spec=pltpu.PrefetchScalarGridSpec(
                num_scalar_prefetch=0,
                grid=grid,
                in_specs=[x_spec, x_spec, we1_spec, be1_spec, w2_spec, b2_spec],
                out_specs=out_specs),
            compiler_params=compiler_params,
            cost_estimate=cost,
        )(x1, x2, We1_f, be1_2d, W2_f, b2_2d)

    if return_z:
        x_hat, z = results
        return x_hat, z
    return results[0]


def rgae_int_reference(x1, x2, We1, be1, W2, b2, alpha=0.0):
    x1 = x1.astype(jnp.float32)
    x2 = x2.astype(jnp.float32)
    z1 = jax.nn.sigmoid(jnp.einsum("hl,pln->phn", We1, x1) + be1[None, :, None])
    z2 = jax.nn.sigmoid(jnp.einsum("hl,pln->phn", We1, x2) + be1[None, :, None])
    z = alpha * z1 + (1.0 - alpha) * z2
    x_hat = jax.nn.sigmoid(jnp.einsum("lh,phn->pln", W2, z) + b2[None, :, None])
    return x_hat, z


if __name__ == "__main__":
    # Small synthetic shapes consistent with the module's forward:
    #   ph=1 (ToTensor adds a leading singleton), L=16 spectral bands,
    #   hidden_dim=8, N pixels per batch.
    ph, L, H = 1, 16, 8

    key = jax.random.PRNGKey(0)
    k_x1, k_x2, k_we1, k_be1, k_w2, k_b2 = jax.random.split(key, 6)

    # Parameter init matching __init__ shapes / scales.
    We1 = 0.01 * jax.random.uniform(k_we1, (H, L), dtype=jnp.float32)
    be1 = jax.random.uniform(k_be1, (H,), dtype=jnp.float32)
    W2 = 0.01 * jax.random.uniform(k_w2, (L, H), dtype=jnp.float32)
    b2 = jax.random.uniform(k_b2, (L,), dtype=jnp.float32)

    TOL_F32 = 5e-4    # exact sigmoid; slack only for MXU f32 matmul rounding
    TOL_BF16 = 2e-2   # bf16 store-cast of values in (0, 1)

    # Case 1: module setting (alpha = 0), lane-aligned pixel count, f32 outputs.
    N = 384
    x1 = jax.random.uniform(k_x1, (ph, L, N), dtype=jnp.float32)
    x2 = jax.random.uniform(k_x2, (ph, L, N), dtype=jnp.float32)
    x_hat, z = rgae_int_forward(x1, x2, We1, be1, W2, b2, alpha=0.0,
                                out_dtype=jnp.float32)
    jax.block_until_ready((x_hat, z))
    x_hat_r, z_r = rgae_int_reference(x1, x2, We1, be1, W2, b2, alpha=0.0)
    assert x_hat.shape == (ph, L, N) and z.shape == (ph, H, N)
    assert bool(jnp.allclose(x_hat, x_hat_r, atol=TOL_F32, rtol=TOL_F32))
    assert bool(jnp.allclose(z, z_r, atol=TOL_F32, rtol=TOL_F32))

    # Case 1b: x_hat-only variant (drops z write traffic) matches.
    x_hat_only = rgae_int_forward(x1, x2, We1, be1, W2, b2, alpha=0.0,
                                  out_dtype=jnp.float32, return_z=False)
    jax.block_until_ready(x_hat_only)
    assert x_hat_only.shape == (ph, L, N)
    assert bool(jnp.allclose(x_hat_only, x_hat_r, atol=TOL_F32, rtol=TOL_F32))

    # Case 2: ragged pixel count (exercises the masked partial trailing block,
    # no wrapper pad/slice), default bf16 outputs.
    N2 = 300
    x1b = jax.random.uniform(jax.random.fold_in(k_x1, 1), (ph, L, N2), dtype=jnp.float32)
    x2b = jax.random.uniform(jax.random.fold_in(k_x2, 1), (ph, L, N2), dtype=jnp.float32)
    x_hat_b, z_b = rgae_int_forward(x1b, x2b, We1, be1, W2, b2, alpha=0.0)
    jax.block_until_ready((x_hat_b, z_b))
    x_hat_br, z_br = rgae_int_reference(x1b, x2b, We1, be1, W2, b2, alpha=0.0)
    assert x_hat_b.shape == (ph, L, N2) and z_b.shape == (ph, H, N2)
    assert x_hat_b.dtype == jnp.bfloat16 and z_b.dtype == jnp.bfloat16
    assert bool(jnp.allclose(x_hat_b.astype(jnp.float32), x_hat_br,
                             atol=TOL_BF16, rtol=TOL_BF16))
    assert bool(jnp.allclose(z_b.astype(jnp.float32), z_br,
                             atol=TOL_BF16, rtol=TOL_BF16))

    # Case 3: general blend path (alpha strictly between 0 and 1), f32 outputs.
    N3 = 256
    x1c = jax.random.uniform(jax.random.fold_in(k_x1, 2), (ph, L, N3), dtype=jnp.float32)
    x2c = jax.random.uniform(jax.random.fold_in(k_x2, 2), (ph, L, N3), dtype=jnp.float32)
    x_hat_c, z_c = rgae_int_forward(x1c, x2c, We1, be1, W2, b2, alpha=0.3,
                                    out_dtype=jnp.float32)
    jax.block_until_ready((x_hat_c, z_c))
    x_hat_cr, z_cr = rgae_int_reference(x1c, x2c, We1, be1, W2, b2, alpha=0.3)
    assert bool(jnp.allclose(x_hat_c, x_hat_cr, atol=TOL_F32, rtol=TOL_F32))
    assert bool(jnp.allclose(z_c, z_cr, atol=TOL_F32, rtol=TOL_F32))

    print("KERNEL_OK")
</pallas_src>

<mosaic_0001>
module attributes {stable_mosaic.version = 11 : i64} {
  func.func @_rgae_single_kernel(%arg0: i32, %arg1: i32, %arg2: memref<1x16x384xf32, #tpu.memory_space<vmem>>, %arg3: memref<8x16xf32, #tpu.memory_space<vmem>>, %arg4: memref<8x1xf32, #tpu.memory_space<vmem>>, %arg5: memref<16x8xf32, #tpu.memory_space<vmem>>, %arg6: memref<16x1xf32, #tpu.memory_space<vmem>>, %arg7: memref<1x16x384xf32, #tpu.memory_space<vmem>>, %arg8: memref<1x8x384xf32, #tpu.memory_space<vmem>>) attributes {dimension_semantics = [#tpu.dimension_semantics<parallel>, #tpu.dimension_semantics<parallel>], iteration_bounds = array<i64: 1, 1>, scalar_prefetch = 0 : i64, scratch_operands = 0 : i64, tpu.core_type = #tpu.core_type<tc>, window_params = [{transform_indices = @transform_0, window_bounds = array<i64: 1, 16, 384>}, {pipeline_mode = #tpu.pipeline_mode<synchronous>, transform_indices = @transform_1, window_bounds = array<i64: 8, 16>}, {pipeline_mode = #tpu.pipeline_mode<synchronous>, transform_indices = @transform_2, window_bounds = array<i64: 8, 1>}, {pipeline_mode = #tpu.pipeline_mode<synchronous>, transform_indices = @transform_3, window_bounds = array<i64: 16, 8>}, {pipeline_mode = #tpu.pipeline_mode<synchronous>, transform_indices = @transform_4, window_bounds = array<i64: 16, 1>}, {transform_indices = @transform_5, window_bounds = array<i64: 1, 16, 384>}, {transform_indices = @transform_6, window_bounds = array<i64: 1, 8, 384>}]} {
    %c0 = arith.constant 0 : index
    %c0_0 = arith.constant 0 : index
    %0 = vector.load %arg3[%c0, %c0_0] : memref<8x16xf32, #tpu.memory_space<vmem>>, vector<8x16xf32>
    %c0_1 = arith.constant 0 : index
    %c0_2 = arith.constant 0 : index
    %c0_3 = arith.constant 0 : index
    %1 = vector.load %arg2[%c0_1, %c0_2, %c0_3] : memref<1x16x384xf32, #tpu.memory_space<vmem>>, vector<1x16x384xf32>
    %2 = vector.shape_cast %1 : vector<1x16x384xf32> to vector<16x384xf32>
    %cst = arith.constant dense<0.000000e+00> : vector<8x384xf32>
    %3 = tpu.matmul %0, %2, %cst {dimension_numbers = #tpu.dot_dimension_numbers<[1], [0], [0], [1], [0, 0, 1, 1], [], []>} : vector<8x16xf32>, vector<16x384xf32>, vector<8x384xf32> -> vector<8x384xf32>
    %c0_4 = arith.constant 0 : index
    %c0_5 = arith.constant 0 : index
    %4 = vector.load %arg4[%c0_4, %c0_5] : memref<8x1xf32, #tpu.memory_space<vmem>>, vector<8x1xf32>
    %5 = vector.broadcast %4 : vector<8x1xf32> to vector<8x384xf32>
    %6 = arith.addf %3, %5 : vector<8x384xf32>
    %cst_6 = arith.constant 0.000000e+00 : f32
    %7 = vector.broadcast %cst_6 : f32 to vector<8x384xf32>
    %8 = arith.subf %7, %6 : vector<8x384xf32>
    %9 = math.exp %8 : vector<8x384xf32>
    %cst_7 = arith.constant 1.000000e+00 : f32
    %10 = vector.broadcast %cst_7 : f32 to vector<8x384xf32>
    %11 = arith.addf %10, %9 : vector<8x384xf32>
    %cst_8 = arith.constant 1.000000e+00 : f32
    %12 = vector.broadcast %cst_8 : f32 to vector<8x384xf32>
    %13 = arith.divf %12, %11 : vector<8x384xf32>
    %c0_9 = arith.constant 0 : index
    %c0_10 = arith.constant 0 : index
    %14 = vector.load %arg5[%c0_9, %c0_10] : memref<16x8xf32, #tpu.memory_space<vmem>>, vector<16x8xf32>
    %cst_11 = arith.constant dense<0.000000e+00> : vector<16x384xf32>
    %15 = tpu.matmul %14, %13, %cst_11 {dimension_numbers = #tpu.dot_dimension_numbers<[1], [0], [0], [1], [0, 0, 1, 1], [], []>} : vector<16x8xf32>, vector<8x384xf32>, vector<16x384xf32> -> vector<16x384xf32>
    %c0_12 = arith.constant 0 : index
    %c0_13 = arith.constant 0 : index
    %16 = vector.load %arg6[%c0_12, %c0_13] : memref<16x1xf32, #tpu.memory_space<vmem>>, vector<16x1xf32>
    %17 = vector.broadcast %16 : vector<16x1xf32> to vector<16x384xf32>
    %18 = arith.addf %15, %17 : vector<16x384xf32>
    %cst_14 = arith.constant 0.000000e+00 : f32
    %19 = vector.broadcast %cst_14 : f32 to vector<16x384xf32>
    %20 = arith.subf %19, %18 : vector<16x384xf32>
    %21 = math.exp %20 : vector<16x384xf32>
    %cst_15 = arith.constant 1.000000e+00 : f32
    %22 = vector.broadcast %cst_15 : f32 to vector<16x384xf32>
    %23 = arith.addf %22, %21 : vector<16x384xf32>
    %cst_16 = arith.constant 1.000000e+00 : f32
    %24 = vector.broadcast %cst_16 : f32 to vector<16x384xf32>
    %25 = arith.divf %24, %23 : vector<16x384xf32>
    %c0_17 = arith.constant 0 : index
    %c0_18 = arith.constant 0 : index
    %c0_19 = arith.constant 0 : index
    %26 = vector.load %arg7[%c0_17, %c0_18, %c0_19] : memref<1x16x384xf32, #tpu.memory_space<vmem>>, vector<1x16x384xf32>
    %27 = vector.shape_cast %26 : vector<1x16x384xf32> to vector<16x384xf32>
    %28 = vector.shape_cast %25 : vector<16x384xf32> to vector<1x16x384xf32>
    tpu.vector_store %arg7[%c0_17, %c0_18, %c0_19], %28 {strides = array<i32>} : memref<1x16x384xf32, #tpu.memory_space<vmem>>, vector<1x16x384xf32>,
    %c0_20 = arith.constant 0 : index
    %c0_21 = arith.constant 0 : index
    %c0_22 = arith.constant 0 : index
    %29 = vector.load %arg8[%c0_20, %c0_21, %c0_22] : memref<1x8x384xf32, #tpu.memory_space<vmem>>, vector<1x8x384xf32>
    %30 = vector.shape_cast %29 : vector<1x8x384xf32> to vector<8x384xf32>
    %31 = vector.shape_cast %13 : vector<8x384xf32> to vector<1x8x384xf32>
    tpu.vector_store %arg8[%c0_20, %c0_21, %c0_22], %31 {strides = array<i32>} : memref<1x8x384xf32, #tpu.memory_space<vmem>>, vector<1x8x384xf32>,
    return
  }
  func.func @transform_0(%arg0: i32, %arg1: i32) -> (i32, i32, i32) {
    %c0_i32 = arith.constant 0 : i32
    %c0_i32_0 = arith.constant 0 : i32
    return %arg0, %c0_i32, %arg1 : i32, i32, i32
  }
  func.func @transform_1(%arg0: i32, %arg1: i32) -> (i32, i32) {
    %c0_i32 = arith.constant 0 : i32
    %c0_i32_0 = arith.constant 0 : i32
    %c0_i32_1 = arith.constant 0 : i32
    return %c0_i32, %c0_i32_0 : i32, i32
  }
  func.func @transform_2(%arg0: i32, %arg1: i32) -> (i32, i32) {
    %c0_i32 = arith.constant 0 : i32
    %c0_i32_0 = arith.constant 0 : i32
    %c0_i32_1 = arith.constant 0 : i32
    return %c0_i32, %c0_i32_0 : i32, i32
  }
  func.func @transform_3(%arg0: i32, %arg1: i32) -> (i32, i32) {
    %c0_i32 = arith.constant 0 : i32
    %c0_i32_0 = arith.constant 0 : i32
    %c0_i32_1 = arith.constant 0 : i32
    return %c0_i32, %c0_i32_0 : i32, i32
  }
  func.func @transform_4(%arg0: i32, %arg1: i32) -> (i32, i32) {
    %c0_i32 = arith.constant 0 : i32
    %c0_i32_0 = arith.constant 0 : i32
    %c0_i32_1 = arith.constant 0 : i32
    return %c0_i32, %c0_i32_0 : i32, i32
  }
  func.func @transform_5(%arg0: i32, %arg1: i32) -> (i32, i32, i32) {
    %c0_i32 = arith.constant 0 : i32
    %c0_i32_0 = arith.constant 0 : i32
    return %arg0, %c0_i32, %arg1 : i32, i32, i32
  }
  func.func @transform_6(%arg0: i32, %arg1: i32) -> (i32, i32, i32) {
    %c0_i32 = arith.constant 0 : i32
    %c0_i32_0 = arith.constant 0 : i32
    return %arg0, %c0_i32, %arg1 : i32, i32, i32
  }
}

</mosaic_0001>

<llo_original>
// kernel: tpu_custom_call.1
$region0: #{tpu_custom_call.1}
  #allocation0 [shape = 'u32[]', space=smem, size = 0x4, offset = 0x4, fixed_abs, tag = 'smem constant byte address 0x4 - core index']
  #allocation1 [shape = 'u32[144,128]{1,0:T(1,128)}', space=vmem, size = 0x12000, scoped, tag = 'internal scratch']
  %s0 = inlined_call_operand.vmem [shape: f32[1,16,384], index: 0, kind: input, shape index: {}]
  %s1 = inlined_call_operand.hbm [shape: f32[8,16], index: 1, kind: input, shape index: {}]
  %s2 = inlined_call_operand.vmem [shape: f32[8,1], index: 2, kind: input, shape index: {}]
  %s3 = inlined_call_operand.vmem [shape: f32[16,8], index: 3, kind: input, shape index: {}]
  %s4 = inlined_call_operand.vmem [shape: f32[16,1], index: 4, kind: input, shape index: {}]
  %s5 = inlined_call_operand.hbm [shape: f32[1,16,384], index: 5, kind: output, shape index: {0}]
  %s6 = inlined_call_operand.hbm [shape: f32[1,8,384], index: 6, kind: output, shape index: {1}]
  %7 = xla_tuple %s5, %s6
  %s8 = sld [smem:[#allocation0]]
  $region42: #{tpu_custom_call.1} parent=0
    _
  %s10 = ssub.s32 1, %s8
  %s11 = scalar_select 0, %s10, %s8
  $region1: #{tpu_custom_call.1} parent=0
    #allocation2 [shape = 'u8[4096]{0}', space=vmem, size = 0x1000, scoped, tag = 'input window, operand 1, single buffered']
    #allocation3 [shape = 's32[1]{0}', space=sflag, size = 0x4, scoped, tag = 'scoped memory for tpu_custom_call.1']
    #allocation4 [shape = 's32[1]{0}', space=sflag, size = 0x4, scoped, tag = 'scoped memory for tpu_custom_call.1']
    #allocation5 [shape = 'u8[24576]{0}', space=vmem, size = 0x6000, scoped, tag = 'output window, operand 0, single buffered']
    #allocation6 [shape = 'u8[12288]{0}', space=vmem, size = 0x3000, scoped, tag = 'output window, operand 1, single buffered']
    #allocation7 [shape = 's32[1]{0}', space=sflag, size = 0x4, scoped, tag = 'scoped memory for tpu_custom_call.1']
    %12 = vsyncpa [#allocation3], 0
    %13 = vsyncpa [#allocation4], 0
    %14 = vsyncpa [#allocation7], 0
    // Predicated region
    $region2: #{tpu_custom_call.1} parent=1 // pred_check
      _
    $region3: #{tpu_custom_call.1} parent=1 // pred_check_branch
      %16 = sbr.rel (0) target = $region5
    $region4: #{tpu_custom_call.1} parent=1 // pred_region
      _
    $region5: #{tpu_custom_call.1} parent=1 // pred_fallthru
      _
    // Predicated region
    $region6: #{tpu_custom_call.1} parent=1 // pred_check
      _
    $region7: #{tpu_custom_call.1} parent=1 // pred_check_branch
      %18 = sbr.rel (0) target = $region9
    $region8: #{tpu_custom_call.1} parent=1 // pred_region
      %s20 = ssub.s32 128, 128
      %21 = vsyncadd [#allocation3], %s20
      %s23 = sshll.u32 [#allocation2], 4
      %s24 = int_to_ptr.vmem [resolvable:$true] %s23
      %26 = dma.hbm_to_vmem [thread:$0]  %s1, 128, %s24, [#allocation3]
    $region9: #{tpu_custom_call.1} parent=1 // pred_fallthru
      _
    // Predicated region
    $region10: #{tpu_custom_call.1} parent=1 // pred_check
      _
    $region11: #{tpu_custom_call.1} parent=1 // pred_check_branch
      %28 = sbr.rel (0) target = $region13
    $region12: #{tpu_custom_call.1} parent=1 // pred_region
      _
    $region13: #{tpu_custom_call.1} parent=1 // pred_fallthru
      _
    // Predicated region
    $region14: #{tpu_custom_call.1} parent=1 // pred_check
      _
    $region15: #{tpu_custom_call.1} parent=1 // pred_check_branch
      %30 = sbr.rel (0) target = $region17
    $region16: #{tpu_custom_call.1} parent=1 // pred_region
      _
    $region17: #{tpu_custom_call.1} parent=1 // pred_fallthru
      _
    // Predicated region
    $region18: #{tpu_custom_call.1} parent=1 // pred_check
      _
    $region19: #{tpu_custom_call.1} parent=1 // pred_check_branch
      %32 = sbr.rel (0) target = $region21
    $region20: #{tpu_custom_call.1} parent=1 // pred_region
      _
    $region21: #{tpu_custom_call.1} parent=1 // pred_fallthru
      _
    // Predicated region
    $region22: #{tpu_custom_call.1} parent=1 // pred_check
      _
    $region23: #{tpu_custom_call.1} parent=1 // pred_check_branch
      %34 = sbr.rel (0) target = $region25
    $region24: #{tpu_custom_call.1} parent=1 // pred_region
      %35 = dma.done [#allocation3], 128
    $region25: #{tpu_custom_call.1} parent=1 // pred_fallthru
      _
    %v36 = vld [vmem:[#allocation2] sm:$0xff]
    %v37 = vld [vmem:[%s0] sm:$0xff]
    %v38 = vld [vmem:[%s0 + $0x8] sm:$0xff]
    %v39 = vld [vmem:[%s0 + $0x10] sm:$0xff]
    %v40 = vld [vmem:[%s0 + $0x18] sm:$0xff]
    %v41 = vld [vmem:[%s0 + $0x20] sm:$0xff]
    %v42 = vld [vmem:[%s0 + $0x28] sm:$0xff]
    %v43 = vld [vmem:[%s2] sm:$0xff]
    %45 = vset.pattern.permute.xlu0 0
    %46 = vperm.xlu0 %45, %v43
    %v47 = vpop.permute.xlu0 %46
    %vm49 = vcmask 130048
    %v51 = vsel %vm49, %v36, 0
    %53 = vmatprep.subr.mxu0 %v38
    %54 = vmatpush1.msra.mxu0 %v37
    %55 = vmatprep.subr.mxu0 %v41
    %56 = vmatpush1.msra.mxu0 %v40
    %57 = vmatprep.subr.mxu0 0.0
    %58 = vmatpush1.msra.mxu0 0.0
    %59 = vmatprep.subr.mxu0 0.0
    %60 = vmatpush1.msra.mxu0 0.0
    %61 = vmatprep.subr.mxu0 0.0
    %62 = vmatpush1.msra.mxu0 0.0
    %63 = vmatprep.subr.mxu0 0.0
    %64 = vmatpush1.msra.mxu0 0.0
    %65 = vmatprep.subr.mxu0 0.0
    %66 = vmatpush1.msra.mxu0 0.0
    %67 = vmatprep.subr.mxu0 0.0
    %68 = vmatpush1.msra.mxu0 0.0
    %69 = vmatprep.subr.mxu0 0.0
    %70 = vmatpush1.msra.mxu0 0.0
    %71 = vmatprep.subr.mxu0 0.0
    %72 = vmatpush1.msra.mxu0 0.0
    %73 = vmatprep.subr.mxu0 0.0
    %74 = vmatpush1.msra.mxu0 0.0
    %75 = vmatprep.subr.mxu0 0.0
    %76 = vmatpush1.msra.mxu0 0.0
    %77 = vmatprep.subr.mxu0 0.0
    %78 = vmatpush1.msra.mxu0 0.0
    %79 = vmatprep.subr.mxu0 0.0
    %80 = vmatpush1.msra.mxu0 0.0
    %81 = vmatprep.subr.mxu0 0.0
    %82 = vmatpush1.msra.mxu0 0.0
    %83 = vmatprep.subr.mxu0 0.0
    %84 = vmatpush1.msra.mxu0 0.0
    %85 = vmatprep.subr.mxu0 0.0
    %86 = vmatpush1.msra.mxu0 0.0
    %87 = vmatprep.subr.mxu0 0.0
    %88 = vmatpush1.msra.mxu0 0.0
    %89 = vmatprep.subr.mxu0 0.0
    %90 = vmatpush1.msra.mxu0 0.0
    %91 = vmatprep.subr.mxu0 0.0
    %92 = vmatpush1.msra.mxu0 0.0
    %93 = vmatprep.subr.mxu0 0.0
    %94 = vmatpush1.msra.mxu0 0.0
    %95 = vmatprep.subr.mxu0 0.0
    %96 = vmatpush1.msra.mxu0 0.0
    %97 = vmatprep.subr.mxu0 0.0
    %98 = vmatpush1.msra.mxu0 0.0
    %99 = vmatprep.subr.mxu0 0.0
    %100 = vmatpush1.msra.mxu0 0.0
    %101 = vmatprep.subr.mxu0 0.0
    %102 = vmatpush1.msra.mxu0 0.0
    %103 = vmatprep.subr.mxu0 0.0
    %104 = vmatpush1.msra.mxu0 0.0
    %105 = vmatprep.subr.mxu0 0.0
    %106 = vmatpush1.msra.mxu0 0.0
    %107 = vmatprep.subr.mxu0 0.0
    %108 = vmatpush1.msra.mxu0 0.0
    %109 = vmatprep.subr.mxu0 0.0
    %110 = vmatpush1.msra.mxu0 0.0
    %111 = vmatprep.subr.mxu0 0.0
    %112 = vmatpush1.msra.mxu0 0.0
    %113 = vmatprep.subr.mxu0 0.0
    %114 = vmatpush1.msra.mxu0 0.0
    %115 = vmatprep.subr.mxu0 0.0
    %116 = vmatpush1.msra.mxu0 0.0
    %117 = vmatprep.mubr.f32.mxu0 0.0
    %118 = vmatmul.mubr.f32.gmra.mrb[0].mxu0 %v51
    %v119 = vpop.f32.mrb[0].mxu0
    %v120 = vadd.f32 %v47, %v119
    %v121 = vpop.f32.mrb[0].mxu0
    %v122 = vadd.f32 %v47, %v121
    %123 = vdwg.mxu0
    %124 = vmatprep.subr.mxu0 0.0
    %125 = vmatpush1.msra.mxu0 %v39
    %126 = vmatprep.subr.mxu0 0.0
    %127 = vmatpush1.msra.mxu0 %v42
    %128 = vmatprep.subr.mxu0 0.0
    %129 = vmatpush1.msra.mxu0 0.0
    %130 = vmatprep.subr.mxu0 0.0
    %131 = vmatpush1.msra.mxu0 0.0
    %132 = vmatprep.subr.mxu0 0.0
    %133 = vmatpush1.msra.mxu0 0.0
    %134 = vmatprep.subr.mxu0 0.0
    %135 = vmatpush1.msra.mxu0 0.0
    %136 = vmatprep.subr.mxu0 0.0
    %137 = vmatpush1.msra.mxu0 0.0
    %138 = vmatprep.subr.mxu0 0.0
    %139 = vmatpush1.msra.mxu0 0.0
    %140 = vmatprep.subr.mxu0 0.0
    %141 = vmatpush1.msra.mxu0 0.0
    %142 = vmatprep.subr.mxu0 0.0
    %143 = vmatpush1.msra.mxu0 0.0
    %144 = vmatprep.subr.mxu0 0.0
    %145 = vmatpush1.msra.mxu0 0.0
    %146 = vmatprep.subr.mxu0 0.0
    %147 = vmatpush1.msra.mxu0 0.0
    %148 = vmatprep.subr.mxu0 0.0
    %149 = vmatpush1.msra.mxu0 0.0
    %150 = vmatprep.subr.mxu0 0.0
    %151 = vmatpush1.msra.mxu0 0.0
    %152 = vmatprep.subr.mxu0 0.0
    %153 = vmatpush1.msra.mxu0 0.0
    %154 = vmatprep.subr.mxu0 0.0
    %155 = vmatpush1.msra.mxu0 0.0
    %156 = vmatprep.subr.mxu0 0.0
    %157 = vmatpush1.msra.mxu0 0.0
    %158 = vmatprep.subr.mxu0 0.0
    %159 = vmatpush1.msra.mxu0 0.0
    %160 = vmatprep.subr.mxu0 0.0
    %161 = vmatpush1.msra.mxu0 0.0
    %162 = vmatprep.subr.mxu0 0.0
    %163 = vmatpush1.msra.mxu0 0.0
    %164 = vmatprep.subr.mxu0 0.0
    %165 = vmatpush1.msra.mxu0 0.0
    %166 = vmatprep.subr.mxu0 0.0
    %167 = vmatpush1.msra.mxu0 0.0
    %168 = vmatprep.subr.mxu0 0.0
    %169 = vmatpush1.msra.mxu0 0.0
    %170 = vmatprep.subr.mxu0 0.0
    %171 = vmatpush1.msra.mxu0 0.0
    %172 = vmatprep.subr.mxu0 0.0
    %173 = vmatpush1.msra.mxu0 0.0
    %174 = vmatprep.subr.mxu0 0.0
    %175 = vmatpush1.msra.mxu0 0.0
    %176 = vmatprep.subr.mxu0 0.0
    %177 = vmatpush1.msra.mxu0 0.0
    %178 = vmatprep.subr.mxu0 0.0
    %179 = vmatpush1.msra.mxu0 0.0
    %180 = vmatprep.subr.mxu0 0.0
    %181 = vmatpush1.msra.mxu0 0.0
    %182 = vmatprep.subr.mxu0 0.0
    %183 = vmatpush1.msra.mxu0 0.0
    %184 = vmatprep.subr.mxu0 0.0
    %185 = vmatpush1.msra.mxu0 0.0
    %186 = vmatprep.subr.mxu0 0.0
    %187 = vmatpush1.msra.mxu0 0.0
    %188 = vmatprep.mubr.f32.mxu0 0.0
    %189 = vmatmul.mubr.f32.gmra.mrb[0].mxu0 %v51
    %v190 = vpop.f32.mrb[0].mxu0
    %v191 = vadd.f32 %v47, %v190
    %v192 = vpop.f32.mrb[0].mxu0
    %193 = vdwg.mxu0
    %v194 = vsub.f32 0.0, %v120
    %v195 = vsub.f32 0.0, %v122
    %v196 = vsub.f32 0.0, %v191
    %v197 = vmul.f32 %v194, 1.442695
    %v198 = vpow.pop %v197
    %v199 = vmul.f32 %v195, 1.442695
    %v200 = vpow.pop %v199
    %v201 = vmul.f32 %v196, 1.442695
    %v202 = vpow.pop %v201
    %v203 = vadd.f32 %v198, 1.0
    %v204 = vadd.f32 %v200, 1.0
    %v205 = vadd.f32 %v202, 1.0
    %v206 = vrcp.pop %v203
    %v207 = vmul.f32 1.0, %v206
    %v208 = vrcp.pop %v204
    %v209 = vmul.f32 1.0, %v208
    %v210 = vrcp.pop %v205
    %v211 = vmul.f32 1.0, %v210
    %v212 = vld [vmem:[%s3] sm:$0xff]
    %v213 = vld [vmem:[%s3 + $0x8] sm:$0xff]
    %v214 = vld [vmem:[%s4] sm:$0xff]
    %v215 = vld [vmem:[%s4 + $0x8] sm:$0xff]
    %217 = vset.pattern.permute.xlu0 0
    %218 = vperm.xlu0 %217, %v214
    %v219 = vpop.permute.xlu0 %218
    %222 = vset.pattern.permute.xlu0 0
    %223 = vperm.xlu0 %222, %v215
    %v224 = vpop.permute.xlu0 %223
    %vm226 = vcmask 64512
    %v228 = vsel %vm226, %v212, 0
    %v231 = vsel %vm226, %v213, 0
    %233 = vmatprep.subr.mxu0 %v209
    %234 = vmatpush1.msra.mxu0 %v207
    %235 = vmatprep.subr.mxu0 0.0
    %236 = vmatpush1.msra.mxu0 0.0
    %237 = vmatprep.subr.mxu0 0.0
    %238 = vmatpush1.msra.mxu0 0.0
    %239 = vmatprep.subr.mxu0 0.0
    %240 = vmatpush1.msra.mxu0 0.0
    %241 = vmatprep.subr.mxu0 0.0
    %242 = vmatpush1.msra.mxu0 0.0
    %243 = vmatprep.subr.mxu0 0.0
    %244 = vmatpush1.msra.mxu0 0.0
    %245 = vmatprep.subr.mxu0 0.0
    %246 = vmatpush1.msra.mxu0 0.0
    %247 = vmatprep.subr.mxu0 0.0
    %248 = vmatpush1.msra.mxu0 0.0
    %249 = vmatprep.subr.mxu0 0.0
    %250 = vmatpush1.msra.mxu0 0.0
    %251 = vmatprep.subr.mxu0 0.0
    %252 = vmatpush1.msra.mxu0 0.0
    %253 = vmatprep.subr.mxu0 0.0
    %254 = vmatpush1.msra.mxu0 0.0
    %255 = vmatprep.subr.mxu0 0.0
    %256 = vmatpush1.msra.mxu0 0.0
    %257 = vmatprep.subr.mxu0 0.0
    %258 = vmatpush1.msra.mxu0 0.0
    %259 = vmatprep.subr.mxu0 0.0
    %260 = vmatpush1.msra.mxu0 0.0
    %261 = vmatprep.subr.mxu0 0.0
    %262 = vmatpush1.msra.mxu0 0.0
    %263 = vmatprep.subr.mxu0 0.0
    %264 = vmatpush1.msra.mxu0 0.0
    %265 = vmatprep.subr.mxu0 0.0
    %266 = vmatpush1.msra.mxu0 0.0
    %267 = vmatprep.subr.mxu0 0.0
    %268 = vmatpush1.msra.mxu0 0.0
    %269 = vmatprep.subr.mxu0 0.0
    %270 = vmatpush1.msra.mxu0 0.0
    %271 = vmatprep.subr.mxu0 0.0
    %272 = vmatpush1.msra.mxu0 0.0
    %273 = vmatprep.subr.mxu0 0.0
    %274 = vmatpush1.msra.mxu0 0.0
    %275 = vmatprep.subr.mxu0 0.0
    %276 = vmatpush1.msra.mxu0 0.0
    %277 = vmatprep.subr.mxu0 0.0
    %278 = vmatpush1.msra.mxu0 0.0
    %279 = vmatprep.subr.mxu0 0.0
    %280 = vmatpush1.msra.mxu0 0.0
    %281 = vmatprep.subr.mxu0 0.0
    %282 = vmatpush1.msra.mxu0 0.0
    %283 = vmatprep.subr.mxu0 0.0
    %284 = vmatpush1.msra.mxu0 0.0
    %285 = vmatprep.subr.mxu0 0.0
    %286 = vmatpush1.msra.mxu0 0.0
    %287 = vmatprep.subr.mxu0 0.0
    %288 = vmatpush1.msra.mxu0 0.0
    %289 = vmatprep.subr.mxu0 0.0
    %290 = vmatpush1.msra.mxu0 0.0
    %291 = vmatprep.subr.mxu0 0.0
    %292 = vmatpush1.msra.mxu0 0.0
    %293 = vmatprep.subr.mxu0 0.0
    %294 = vmatpush1.msra.mxu0 0.0
    %295 = vmatprep.subr.mxu0 0.0
    %296 = vmatpush1.msra.mxu0 0.0
    %297 = vmatprep.mubr.f32.mxu0 0.0
    %298 = vmatmul.mubr.f32.gmra.mrb[0].mxu0 %v228
    %v299 = vpop.f32.mrb[0].mxu0
    %v300 = vadd.f32 %v219, %v299
    %v301 = vpop.f32.mrb[0].mxu0
    %v302 = vadd.f32 %v219, %v301
    %303 = vmatprep.mubr.f32.mxu0 0.0
    %304 = vmatmul.mubr.f32.gmra.mrb[0].mxu0 %v231
    %v305 = vpop.f32.mrb[0].mxu0
    %v306 = vadd.f32 %v224, %v305
    %v307 = vpop.f32.mrb[0].mxu0
    %v308 = vadd.f32 %v224, %v307
    %309 = vdwg.mxu0
    %310 = vmatprep.subr.mxu0 0.0
    %311 = vmatpush1.msra.mxu0 %v211
    %312 = vmatprep.subr.mxu0 0.0
    %313 = vmatpush1.msra.mxu0 0.0
    %314 = vmatprep.subr.mxu0 0.0
    %315 = vmatpush1.msra.mxu0 0.0
    %316 = vmatprep.subr.mxu0 0.0
    %317 = vmatpush1.msra.mxu0 0.0
    %318 = vmatprep.subr.mxu0 0.0
    %319 = vmatpush1.msra.mxu0 0.0
    %320 = vmatprep.subr.mxu0 0.0
    %321 = vmatpush1.msra.mxu0 0.0
    %322 = vmatprep.subr.mxu0 0.0
    %323 = vmatpush1.msra.mxu0 0.0
    %324 = vmatprep.subr.mxu0 0.0
    %325 = vmatpush1.msra.mxu0 0.0
    %326 = vmatprep.subr.mxu0 0.0
    %327 = vmatpush1.msra.mxu0 0.0
    %328 = vmatprep.subr.mxu0 0.0
    %329 = vmatpush1.msra.mxu0 0.0
    %330 = vmatprep.subr.mxu0 0.0
    %331 = vmatpush1.msra.mxu0 0.0
    %332 = vmatprep.subr.mxu0 0.0
    %333 = vmatpush1.msra.mxu0 0.0
    %334 = vmatprep.subr.mxu0 0.0
    %335 = vmatpush1.msra.mxu0 0.0
    %336 = vmatprep.subr.mxu0 0.0
    %337 = vmatpush1.msra.mxu0 0.0
    %338 = vmatprep.subr.mxu0 0.0
    %339 = vmatpush1.msra.mxu0 0.0
    %340 = vmatprep.subr.mxu0 0.0
    %341 = vmatpush1.msra.mxu0 0.0
    %342 = vmatprep.subr.mxu0 0.0
    %343 = vmatpush1.msra.mxu0 0.0
    %344 = vmatprep.subr.mxu0 0.0
    %345 = vmatpush1.msra.mxu0 0.0
    %346 = vmatprep.subr.mxu0 0.0
    %347 = vmatpush1.msra.mxu0 0.0
    %348 = vmatprep.subr.mxu0 0.0
    %349 = vmatpush1.msra.mxu0 0.0
    %350 = vmatprep.subr.mxu0 0.0
    %351 = vmatpush1.msra.mxu0 0.0
    %352 = vmatprep.subr.mxu0 0.0
    %353 = vmatpush1.msra.mxu0 0.0
    %354 = vmatprep.subr.mxu0 0.0
    %355 = vmatpush1.msra.mxu0 0.0
    %356 = vmatprep.subr.mxu0 0.0
    %357 = vmatpush1.msra.mxu0 0.0
    %358 = vmatprep.subr.mxu0 0.0
    %359 = vmatpush1.msra.mxu0 0.0
    %360 = vmatprep.subr.mxu0 0.0
    %361 = vmatpush1.msra.mxu0 0.0
    %362 = vmatprep.subr.mxu0 0.0
    %363 = vmatpush1.msra.mxu0 0.0
    %364 = vmatprep.subr.mxu0 0.0
    %365 = vmatpush1.msra.mxu0 0.0
    %366 = vmatprep.subr.mxu0 0.0
    %367 = vmatpush1.msra.mxu0 0.0
    %368 = vmatprep.subr.mxu0 0.0
    %369 = vmatpush1.msra.mxu0 0.0
    %370 = vmatprep.subr.mxu0 0.0
    %371 = vmatpush1.msra.mxu0 0.0
    %372 = vmatprep.subr.mxu0 0.0
    %373 = vmatpush1.msra.mxu0 0.0
    %374 = vmatprep.mubr.f32.mxu0 0.0
    %375 = vmatmul.mubr.f32.gmra.mrb[0].mxu0 %v228
    %v376 = vpop.f32.mrb[0].mxu0
    %v377 = vadd.f32 %v219, %v376
    %v378 = vpop.f32.mrb[0].mxu0
    %379 = vmatprep.mubr.f32.mxu0 0.0
    %380 = vmatmul.mubr.f32.gmra.mrb[0].mxu0 %v231
    %v381 = vpop.f32.mrb[0].mxu0
    %v382 = vadd.f32 %v224, %v381
    %v383 = vpop.f32.mrb[0].mxu0
    %384 = vdwg.mxu0
    %v385 = vsub.f32 0.0, %v300
    %v386 = vsub.f32 0.0, %v302
    %v387 = vsub.f32 0.0, %v377
    %v388 = vsub.f32 0.0, %v306
    %v389 = vsub.f32 0.0, %v308
    %v390 = vsub.f32 0.0, %v382
    %v391 = vmul.f32 %v385, 1.442695
    %v392 = vpow.pop %v391
    %v393 = vmul.f32 %v386, 1.442695
    %v394 = vpow.pop %v393
    %v395 = vmul.f32 %v387, 1.442695
    %v396 = vpow.pop %v395
    %v397 = vmul.f32 %v388, 1.442695
    %v398 = vpow.pop %v397
    %v399 = vmul.f32 %v389, 1.442695
    %v400 = vpow.pop %v399
    %v401 = vmul.f32 %v390, 1.442695
    %v402 = vpow.pop %v401
    %v403 = vadd.f32 %v392, 1.0
    %v404 = vadd.f32 %v394, 1.0
    %v405 = vadd.f32 %v396, 1.0
    %v406 = vadd.f32 %v398, 1.0
    %v407 = vadd.f32 %v400, 1.0
    %v408 = vadd.f32 %v402, 1.0
    %v409 = vrcp.pop %v403
    %v410 = vmul.f32 1.0, %v409
    %v411 = vrcp.pop %v404
    %v412 = vmul.f32 1.0, %v411
    %v413 = vrcp.pop %v405
    %v414 = vmul.f32 1.0, %v413
    %v415 = vrcp.pop %v406
    %v416 = vmul.f32 1.0, %v415
    %v417 = vrcp.pop %v407
    %v418 = vmul.f32 1.0, %v417
    %v419 = vrcp.pop %v408
    %v420 = vmul.f32 1.0, %v419
    %421 = vst [vmem:[#allocation5] sm:$0xff] %v410
    %422 = vst [vmem:[#allocation5 + $0x8] sm:$0xff] %v412
    %423 = vst [vmem:[#allocation5 + $0x10] sm:$0xff] %v414
    %424 = vst [vmem:[#allocation5 + $0x18] sm:$0xff] %v416
    %425 = vst [vmem:[#allocation5 + $0x20] sm:$0xff] %v418
    %426 = vst [vmem:[#allocation5 + $0x28] sm:$0xff] %v420
    %427 = vst [vmem:[#allocation6] sm:$0xff] %v207
    %428 = vst [vmem:[#allocation6 + $0x8] sm:$0xff] %v209
    %429 = vst [vmem:[#allocation6 + $0x10] sm:$0xff] %v211
    // Predicated region
    $region26: #{tpu_custom_call.1} parent=1 // pred_check
      _
    $region27: #{tpu_custom_call.1} parent=1 // pred_check_branch
      %431 = sbr.rel (0) target = $region29
    $region28: #{tpu_custom_call.1} parent=1 // pred_region
      %s433 = ssub.s32 768, 768
      %434 = vsyncadd [#allocation4], %s433
      %s435 = sshll.u32 [#allocation5], 4
      %s436 = int_to_ptr.vmem [resolvable:$true] %s435
      %441 = dma.vmem_to_hbm [thread:$0]  %s436, 768, %s5, [#allocation4], 384, 384, 24
    $region29: #{tpu_custom_call.1} parent=1 // pred_fallthru
      _
    // Predicated region
    $region30: #{tpu_custom_call.1} parent=1 // pred_check
      _
    $region31: #{tpu_custom_call.1} parent=1 // pred_check_branch
      %443 = sbr.rel (0) target = $region33
    $region32: #{tpu_custom_call.1} parent=1 // pred_region
      %s445 = ssub.s32 384, 384
      %446 = vsyncadd [#allocation7], %s445
      %s448 = sshll.u32 [#allocation6], 4
      %s449 = int_to_ptr.vmem [resolvable:$true] %s448
      %451 = dma.vmem_to_hbm [thread:$0]  %s449, 384, %s6, [#allocation7]
    $region33: #{tpu_custom_call.1} parent=1 // pred_fallthru
      _
    // Predicated region
    $region34: #{tpu_custom_call.1} parent=1 // pred_check
      _
    $region35: #{tpu_custom_call.1} parent=1 // pred_check_branch
      %453 = sbr.rel (0) target = $region37
    $region36: #{tpu_custom_call.1} parent=1 // pred_region
      %454 = dma.done [#allocation4], 768
    $region37: #{tpu_custom_call.1} parent=1 // pred_fallthru
      _
    // Predicated region
    $region38: #{tpu_custom_call.1} parent=1 // pred_check
      _
    $region39: #{tpu_custom_call.1} parent=1 // pred_check_branch
      %456 = sbr.rel (0) target = $region41
    $region40: #{tpu_custom_call.1} parent=1 // pred_region
      %457 = dma.done [#allocation7], 384
    $region41: #{tpu_custom_call.1} parent=1 // pred_fallthru
      _
    %458 = vsyncpa [#allocation3], 1
    %459 = vsyncpa [#allocation4], 1
    %460 = vsyncpa [#allocation7], 1

</llo_original>
